<compile_context>
chip_gen: v7x
topology: tpu7x:2x2x1
jax: 0.10.0
libtpu: 0.0.40
codegen_flags: <defaults>
</compile_context>

<pallas_src>
import functools

import jax
import jax.numpy as jnp
from jax.experimental import pallas as pl
from jax.experimental.pallas import tpu as pltpu

_EPS = 1e-5
_LANE = 128


def _projector_kernel(x_ref,
                      w1_ref, g1_ref, b1_ref,
                      w2_ref, g2_ref, b2_ref,
                      w3_ref,
                      o_ref):
    """Whole projector MLP in one kernel (whole batch resident in VMEM).

    Matmul operands are bf16 (MXU-native); accumulation and all BatchNorm
    math (stats, folded scale/shift) are f32.
    """
    inv_b = 1.0 / x_ref.shape[0]  # static batch size

    def _bn_relu(h, gamma, beta):
        # Batch stats as two back-to-back XLU reductions (f32, single pass).
        mean = jnp.sum(h, axis=0, keepdims=True) * inv_b
        ex2 = jnp.sum(h * h, axis=0, keepdims=True) * inv_b
        var = jnp.maximum(ex2 - mean * mean, 0.0)  # guard fp cancellation
        # Fold BN affine into one per-column scale/shift -> single (B,H) pass.
        scale = gamma * jax.lax.rsqrt(var + _EPS)   # rsqrt -> EUP slot
        shift = beta - mean * scale
        return jnp.maximum(h * scale + shift, 0.0)

    # Stage 1: Linear -> BN -> ReLU   (bf16 x bf16 -> f32 accumulate)
    h = jnp.dot(x_ref[...], w1_ref[...], preferred_element_type=jnp.float32)
    h = _bn_relu(h, g1_ref[...], b1_ref[...])

    # Stage 2: Linear -> BN -> ReLU
    h = jnp.dot(h.astype(jnp.bfloat16), w2_ref[...],
                preferred_element_type=jnp.float32)
    h = _bn_relu(h, g2_ref[...], b2_ref[...])

    # Final Linear (no bias, no BN, no ReLU)
    o_ref[...] = jnp.dot(h.astype(jnp.bfloat16), w3_ref[...],
                         preferred_element_type=jnp.float32).astype(o_ref.dtype)


def _round_up(n, m):
    return ((n + m - 1) // m) * m


def prepare_projector_params(params):
    """One-time parameter prep — call ONCE, outside the per-step hot path.

    PyTorch Linear weights are (out, in); transpose to (in, out), zero-pad
    every feature dim to the 128-lane width (unmasked, lane-dense stores),
    and cast the matmul weights to bf16.  Zero weight columns keep padded
    feature columns exactly 0; zero weight rows make them contribute nothing
    to the next matmul.  Returns (arrays, d_out).
    """
    f32, bf16 = jnp.float32, jnp.bfloat16
    d0 = params["w1"].shape[1]
    d1, d2, d3 = (params[k].shape[0] for k in ("w1", "w2", "w3"))
    d1p, d2p, d3p = (_round_up(d, _LANE) for d in (d1, d2, d3))

    def pad2(a, rows, cols):
        return jnp.pad(a, ((0, rows - a.shape[0]), (0, cols - a.shape[1])))

    arrays = dict(
        w1=pad2(params["w1"].T.astype(f32), d0, d1p).astype(bf16),
        w2=pad2(params["w2"].T.astype(f32), d1p, d2p).astype(bf16),
        w3=pad2(params["w3"].T.astype(f32), d2p, d3p).astype(bf16),
        # gamma padded with 0.0 -> scale on dead lane-pad columns is exactly 0.
        g1=jnp.pad(params["gamma1"].astype(f32), (0, d1p - d1)).reshape(1, d1p),
        b1=jnp.pad(params["beta1"].astype(f32), (0, d1p - d1)).reshape(1, d1p),
        g2=jnp.pad(params["gamma2"].astype(f32), (0, d2p - d2)).reshape(1, d2p),
        b2=jnp.pad(params["beta2"].astype(f32), (0, d2p - d2)).reshape(1, d2p),
    )
    return arrays, d3


def projector_forward(features, prepped, *, d_out, slice_output=True):
    """features: (B, hidden).  prepped: arrays from prepare_projector_params."""
    B, d0 = features.shape
    assert B >= 2, "BatchNorm1d batch statistics require B >= 2"

    x = features.astype(jnp.bfloat16)
    args = (x, prepped["w1"], prepped["g1"], prepped["b1"],
            prepped["w2"], prepped["g2"], prepped["b2"], prepped["w3"])

    d1p = prepped["w1"].shape[1]
    d2p = prepped["w2"].shape[1]
    d3p = prepped["w3"].shape[1]

    # Advisory cost hint for XLA's outer scheduler.
    bytes_accessed = (sum(int(a.size) * a.dtype.itemsize for a in args)
                      + B * d3p * 4)
    flops = 2 * B * (d0 * d1p + d1p * d2p + d2p * d3p) + 10 * B * (d1p + d2p)
    cost = pl.CostEstimate(flops=flops, transcendentals=2 * (d1p + d2p),
                           bytes_accessed=bytes_accessed)

    # Whole problem resident in VMEM; set an explicit limit with headroom so
    # the scoped-VMEM default (16/32 MiB) never binds, while staying well under
    # v7x's 64 MiB physical capacity.
    vmem_bytes = bytes_accessed + B * (d1p + d2p) * 4  # + live intermediates
    vmem_limit = int(min(max(2 * vmem_bytes + (1 << 20), 4 << 20), 48 << 20))

    vmem = pl.BlockSpec(memory_space=pltpu.MemorySpace.VMEM)
    out_padded = pl.pallas_call(
        _projector_kernel,
        out_shape=jax.ShapeDtypeStruct((B, d3p), jnp.float32),
        in_specs=[vmem] * len(args),
        out_specs=vmem,
        cost_estimate=cost,
        compiler_params=pltpu.CompilerParams(vmem_limit_bytes=vmem_limit),
    )(*args)

    # Consumers that can take the lane-padded (B, d3p) slab should pass
    # slice_output=False and skip this extra copy.
    return out_padded[:, :d_out] if slice_output else out_padded


def make_params(key, hidden_size, sizes):
    """Deterministic synthetic parameters.

    sizes = [hidden_size, d1, d2, d_out]  (config.hidden_size + projector spec)
    PyTorch Linear weight layout: (out_features, in_features).
    """
    k = jax.random.split(key, 3)
    d0, d1, d2, d3 = sizes
    params = {
        "w1": 0.05 * jax.random.normal(k[0], (d1, d0), jnp.float32),
        "w2": 0.05 * jax.random.normal(k[1], (d2, d1), jnp.float32),
        "w3": 0.05 * jax.random.normal(k[2], (d3, d2), jnp.float32),
        # BatchNorm1d affine params: init weight=1, bias=0 (PyTorch default).
        "gamma1": jnp.ones((d1,), jnp.float32),
        "beta1": jnp.zeros((d1,), jnp.float32),
        "gamma2": jnp.ones((d2,), jnp.float32),
        "beta2": jnp.zeros((d2,), jnp.float32),
    }
    return params


def _reference(features, params):
    """Pure-JAX f32 reference (two-pass batch variance, as in PyTorch)."""
    h = features @ params["w1"].T
    m = h.mean(0, keepdims=True)
    v = ((h - m) ** 2).mean(0, keepdims=True)
    h = (h - m) / jnp.sqrt(v + _EPS) * params["gamma1"] + params["beta1"]
    h = jnp.maximum(h, 0.0)
    h = h @ params["w2"].T
    m = h.mean(0, keepdims=True)
    v = ((h - m) ** 2).mean(0, keepdims=True)
    h = (h - m) / jnp.sqrt(v + _EPS) * params["gamma2"] + params["beta2"]
    h = jnp.maximum(h, 0.0)
    return h @ params["w3"].T


if __name__ == "__main__":
    # config.hidden_size = 32, extra_config.projector = "64-64-32"
    hidden_size = 32
    sizes = [hidden_size, 64, 64, 32]
    batch = 8  # small demo (multiple of 8 -> full f32 sublanes; BN needs B>=2)

    key = jax.random.PRNGKey(0)
    k_feat, k_param = jax.random.split(key)
    features = jax.random.normal(k_feat, (batch, hidden_size), jnp.float32)
    params = make_params(k_param, hidden_size, sizes)

    # One-time parameter prep (hoisted out of the per-call hot path), then a
    # jitted forward that only casts features and launches the kernel.
    prepped, d_out = prepare_projector_params(params)
    fwd = jax.jit(functools.partial(projector_forward, d_out=d_out))

    out = jax.block_until_ready(fwd(features, prepped))

    ref = _reference(features, params)
    assert out.shape == (batch, sizes[-1])
    # bf16 MXU operands (f32 accumulation) -> looser tolerance than pure f32.
    assert jnp.allclose(out, ref, atol=3e-2, rtol=3e-2), "mismatch vs reference"

    print("KERNEL_OK")
</pallas_src>

<mosaic_0001>
module attributes {stable_mosaic.version = 11 : i64} {
  func.func @_projector_kernel(%arg0: memref<8x32xbf16, #tpu.memory_space<vmem>>, %arg1: memref<32x128xbf16, #tpu.memory_space<vmem>>, %arg2: memref<1x128xf32, #tpu.memory_space<vmem>>, %arg3: memref<1x128xf32, #tpu.memory_space<vmem>>, %arg4: memref<128x128xbf16, #tpu.memory_space<vmem>>, %arg5: memref<1x128xf32, #tpu.memory_space<vmem>>, %arg6: memref<1x128xf32, #tpu.memory_space<vmem>>, %arg7: memref<128x128xbf16, #tpu.memory_space<vmem>>, %arg8: memref<8x128xf32, #tpu.memory_space<vmem>>) attributes {dimension_semantics = [], scalar_prefetch = 0 : i64, scratch_operands = 0 : i64, tpu.core_type = #tpu.core_type<tc>} {
    %c0 = arith.constant 0 : index
    %c0_0 = arith.constant 0 : index
    %0 = vector.load %arg0[%c0, %c0_0] : memref<8x32xbf16, #tpu.memory_space<vmem>>, vector<8x32xbf16>
    %c0_1 = arith.constant 0 : index
    %c0_2 = arith.constant 0 : index
    %1 = vector.load %arg1[%c0_1, %c0_2] : memref<32x128xbf16, #tpu.memory_space<vmem>>, vector<32x128xbf16>
    %cst = arith.constant dense<0.000000e+00> : vector<8x128xf32>
    %2 = tpu.matmul %0, %1, %cst {dimension_numbers = #tpu.dot_dimension_numbers<[1], [0], [0], [1], [0, 0, 1, 1], [], []>} : vector<8x32xbf16>, vector<32x128xbf16>, vector<8x128xf32> -> vector<8x128xf32>
    %c0_3 = arith.constant 0 : index
    %c0_4 = arith.constant 0 : index
    %3 = vector.load %arg2[%c0_3, %c0_4] : memref<1x128xf32, #tpu.memory_space<vmem>>, vector<1x128xf32>
    %c0_5 = arith.constant 0 : index
    %c0_6 = arith.constant 0 : index
    %4 = vector.load %arg3[%c0_5, %c0_6] : memref<1x128xf32, #tpu.memory_space<vmem>>, vector<1x128xf32>
    %cst_7 = arith.constant dense<0.000000e+00> : vector<128xf32>
    %5 = vector.multi_reduction <add>, %2, %cst_7 [0] : vector<8x128xf32> to vector<128xf32>
    %6 = vector.shape_cast %5 : vector<128xf32> to vector<1x128xf32>
    %cst_8 = arith.constant 1.250000e-01 : f32
    %7 = vector.broadcast %cst_8 : f32 to vector<1x128xf32>
    %8 = arith.mulf %6, %7 : vector<1x128xf32>
    %9 = arith.mulf %2, %2 : vector<8x128xf32>
    %cst_9 = arith.constant dense<0.000000e+00> : vector<128xf32>
    %10 = vector.multi_reduction <add>, %9, %cst_9 [0] : vector<8x128xf32> to vector<128xf32>
    %11 = vector.shape_cast %10 : vector<128xf32> to vector<1x128xf32>
    %cst_10 = arith.constant 1.250000e-01 : f32
    %12 = vector.broadcast %cst_10 : f32 to vector<1x128xf32>
    %13 = arith.mulf %11, %12 : vector<1x128xf32>
    %14 = arith.mulf %8, %8 : vector<1x128xf32>
    %15 = arith.subf %13, %14 : vector<1x128xf32>
    %cst_11 = arith.constant 0.000000e+00 : f32
    %16 = vector.broadcast %cst_11 : f32 to vector<1x128xf32>
    %17 = arith.maximumf %15, %16 : vector<1x128xf32>
    %cst_12 = arith.constant 9.99999974E-6 : f32
    %18 = vector.broadcast %cst_12 : f32 to vector<1x128xf32>
    %19 = arith.addf %17, %18 : vector<1x128xf32>
    %20 = math.rsqrt %19 : vector<1x128xf32>
    %21 = arith.mulf %3, %20 : vector<1x128xf32>
    %22 = arith.mulf %8, %21 : vector<1x128xf32>
    %23 = arith.subf %4, %22 : vector<1x128xf32>
    %24 = vector.broadcast %21 : vector<1x128xf32> to vector<8x128xf32>
    %25 = arith.mulf %2, %24 : vector<8x128xf32>
    %26 = vector.broadcast %23 : vector<1x128xf32> to vector<8x128xf32>
    %27 = arith.addf %25, %26 : vector<8x128xf32>
    %cst_13 = arith.constant 0.000000e+00 : f32
    %28 = vector.broadcast %cst_13 : f32 to vector<8x128xf32>
    %29 = arith.maximumf %27, %28 : vector<8x128xf32>
    %30 = arith.truncf %29 : vector<8x128xf32> to vector<8x128xbf16>
    %c0_14 = arith.constant 0 : index
    %c0_15 = arith.constant 0 : index
    %31 = vector.load %arg4[%c0_14, %c0_15] : memref<128x128xbf16, #tpu.memory_space<vmem>>, vector<128x128xbf16>
    %cst_16 = arith.constant dense<0.000000e+00> : vector<8x128xf32>
    %32 = tpu.matmul %30, %31, %cst_16 {dimension_numbers = #tpu.dot_dimension_numbers<[1], [0], [0], [1], [0, 0, 1, 1], [], []>} : vector<8x128xbf16>, vector<128x128xbf16>, vector<8x128xf32> -> vector<8x128xf32>
    %c0_17 = arith.constant 0 : index
    %c0_18 = arith.constant 0 : index
    %33 = vector.load %arg5[%c0_17, %c0_18] : memref<1x128xf32, #tpu.memory_space<vmem>>, vector<1x128xf32>
    %c0_19 = arith.constant 0 : index
    %c0_20 = arith.constant 0 : index
    %34 = vector.load %arg6[%c0_19, %c0_20] : memref<1x128xf32, #tpu.memory_space<vmem>>, vector<1x128xf32>
    %cst_21 = arith.constant dense<0.000000e+00> : vector<128xf32>
    %35 = vector.multi_reduction <add>, %32, %cst_21 [0] : vector<8x128xf32> to vector<128xf32>
    %36 = vector.shape_cast %35 : vector<128xf32> to vector<1x128xf32>
    %cst_22 = arith.constant 1.250000e-01 : f32
    %37 = vector.broadcast %cst_22 : f32 to vector<1x128xf32>
    %38 = arith.mulf %36, %37 : vector<1x128xf32>
    %39 = arith.mulf %32, %32 : vector<8x128xf32>
    %cst_23 = arith.constant dense<0.000000e+00> : vector<128xf32>
    %40 = vector.multi_reduction <add>, %39, %cst_23 [0] : vector<8x128xf32> to vector<128xf32>
    %41 = vector.shape_cast %40 : vector<128xf32> to vector<1x128xf32>
    %cst_24 = arith.constant 1.250000e-01 : f32
    %42 = vector.broadcast %cst_24 : f32 to vector<1x128xf32>
    %43 = arith.mulf %41, %42 : vector<1x128xf32>
    %44 = arith.mulf %38, %38 : vector<1x128xf32>
    %45 = arith.subf %43, %44 : vector<1x128xf32>
    %cst_25 = arith.constant 0.000000e+00 : f32
    %46 = vector.broadcast %cst_25 : f32 to vector<1x128xf32>
    %47 = arith.maximumf %45, %46 : vector<1x128xf32>
    %cst_26 = arith.constant 9.99999974E-6 : f32
    %48 = vector.broadcast %cst_26 : f32 to vector<1x128xf32>
    %49 = arith.addf %47, %48 : vector<1x128xf32>
    %50 = math.rsqrt %49 : vector<1x128xf32>
    %51 = arith.mulf %33, %50 : vector<1x128xf32>
    %52 = arith.mulf %38, %51 : vector<1x128xf32>
    %53 = arith.subf %34, %52 : vector<1x128xf32>
    %54 = vector.broadcast %51 : vector<1x128xf32> to vector<8x128xf32>
    %55 = arith.mulf %32, %54 : vector<8x128xf32>
    %56 = vector.broadcast %53 : vector<1x128xf32> to vector<8x128xf32>
    %57 = arith.addf %55, %56 : vector<8x128xf32>
    %cst_27 = arith.constant 0.000000e+00 : f32
    %58 = vector.broadcast %cst_27 : f32 to vector<8x128xf32>
    %59 = arith.maximumf %57, %58 : vector<8x128xf32>
    %60 = arith.truncf %59 : vector<8x128xf32> to vector<8x128xbf16>
    %c0_28 = arith.constant 0 : index
    %c0_29 = arith.constant 0 : index
    %61 = vector.load %arg7[%c0_28, %c0_29] : memref<128x128xbf16, #tpu.memory_space<vmem>>, vector<128x128xbf16>
    %cst_30 = arith.constant dense<0.000000e+00> : vector<8x128xf32>
    %62 = tpu.matmul %60, %61, %cst_30 {dimension_numbers = #tpu.dot_dimension_numbers<[1], [0], [0], [1], [0, 0, 1, 1], [], []>} : vector<8x128xbf16>, vector<128x128xbf16>, vector<8x128xf32> -> vector<8x128xf32>
    %c0_31 = arith.constant 0 : index
    %c0_32 = arith.constant 0 : index
    %63 = vector.load %arg8[%c0_31, %c0_32] : memref<8x128xf32, #tpu.memory_space<vmem>>, vector<8x128xf32>
    tpu.vector_store %arg8[%c0_31, %c0_32], %62 {strides = array<i32>} : memref<8x128xf32, #tpu.memory_space<vmem>>, vector<8x128xf32>,
    return
  }
}

</mosaic_0001>

<llo_original>
// kernel: projector_forward.1
$region0: #{projector_forward.1}
  #allocation0 [shape = 'u32[]', space=smem, size = 0x4, offset = 0x4, fixed_abs, tag = 'smem constant byte address 0x4 - core index']
  #allocation1 [shape = 'u32[144,128]{1,0:T(1,128)}', space=vmem, size = 0x12000, scoped, tag = 'internal scratch']
  %s0 = inlined_call_operand.vmem [shape: bf16[8,32], index: 0, kind: input, shape index: {}]
  %s1 = inlined_call_operand.vmem [shape: bf16[32,128], index: 1, kind: input, shape index: {}]
  %s2 = inlined_call_operand.vmem [shape: f32[1,128], index: 2, kind: input, shape index: {}]
  %s3 = inlined_call_operand.vmem [shape: f32[1,128], index: 3, kind: input, shape index: {}]
  %s4 = inlined_call_operand.hbm [shape: bf16[128,128], index: 4, kind: input, shape index: {}]
  %s5 = inlined_call_operand.vmem [shape: f32[1,128], index: 5, kind: input, shape index: {}]
  %s6 = inlined_call_operand.vmem [shape: f32[1,128], index: 6, kind: input, shape index: {}]
  %s7 = inlined_call_operand.hbm [shape: bf16[128,128], index: 7, kind: input, shape index: {}]
  %s8 = inlined_call_operand.hbm [shape: f32[8,128], index: 8, kind: output, shape index: {}]
  %s9 = sld [smem:[#allocation0]]
  $region50: #{projector_forward.1} parent=0
    _
  %s11 = ssub.s32 1, %s9
  %s12 = scalar_select 0, %s11, %s9
  $region1: #{projector_forward.1} parent=0
    #allocation2 [shape = 'u8[32768]{0}', space=vmem, size = 0x8000, scoped, tag = 'input window, operand 4, single buffered']
    #allocation3 [shape = 's32[1]{0}', space=sflag, size = 0x4, scoped, tag = 'scoped memory for projector_forward.1']
    #allocation4 [shape = 's32[1]{0}', space=sflag, size = 0x4, scoped, tag = 'scoped memory for projector_forward.1']
    #allocation5 [shape = 'u8[32768]{0}', space=vmem, size = 0x8000, scoped, tag = 'input window, operand 7, single buffered']
    #allocation6 [shape = 's32[1]{0}', space=sflag, size = 0x4, scoped, tag = 'scoped memory for projector_forward.1']
    #allocation7 [shape = 'u8[4096]{0}', space=vmem, size = 0x1000, scoped, tag = 'output window, operand 0, single buffered']
    %13 = vsyncpa [#allocation3], 0
    %14 = vsyncpa [#allocation6], 0
    %15 = vsyncpa [#allocation4], 0
    // Predicated region
    $region2: #{projector_forward.1} parent=1 // pred_check
      _
    $region3: #{projector_forward.1} parent=1 // pred_check_branch
      %17 = sbr.rel (0) target = $region5
    $region4: #{projector_forward.1} parent=1 // pred_region
      _
    $region5: #{projector_forward.1} parent=1 // pred_fallthru
      _
    // Predicated region
    $region6: #{projector_forward.1} parent=1 // pred_check
      _
    $region7: #{projector_forward.1} parent=1 // pred_check_branch
      %19 = sbr.rel (0) target = $region9
    $region8: #{projector_forward.1} parent=1 // pred_region
      _
    $region9: #{projector_forward.1} parent=1 // pred_fallthru
      _
    // Predicated region
    $region10: #{projector_forward.1} parent=1 // pred_check
      _
    $region11: #{projector_forward.1} parent=1 // pred_check_branch
      %21 = sbr.rel (0) target = $region13
    $region12: #{projector_forward.1} parent=1 // pred_region
      _
    $region13: #{projector_forward.1} parent=1 // pred_fallthru
      _
    // Predicated region
    $region14: #{projector_forward.1} parent=1 // pred_check
      _
    $region15: #{projector_forward.1} parent=1 // pred_check_branch
      %23 = sbr.rel (0) target = $region17
    $region16: #{projector_forward.1} parent=1 // pred_region
      _
    $region17: #{projector_forward.1} parent=1 // pred_fallthru
      _
    // Predicated region
    $region18: #{projector_forward.1} parent=1 // pred_check
      _
    $region19: #{projector_forward.1} parent=1 // pred_check_branch
      %25 = sbr.rel (0) target = $region21
    $region20: #{projector_forward.1} parent=1 // pred_region
      %s27 = ssub.s32 1024, 1024
      %28 = vsyncadd [#allocation3], %s27
      %s29 = sshll.u32 [#allocation2], 4
      %s30 = int_to_ptr.vmem [resolvable:$true] %s29
      %35 = dma.hbm_to_vmem [thread:$0]  %s4, 1024, %s30, [#allocation3], 64, 64, 4
    $region21: #{projector_forward.1} parent=1 // pred_fallthru
      _
    // Predicated region
    $region22: #{projector_forward.1} parent=1 // pred_check
      _
    $region23: #{projector_forward.1} parent=1 // pred_check_branch
      %37 = sbr.rel (0) target = $region25
    $region24: #{projector_forward.1} parent=1 // pred_region
      _
    $region25: #{projector_forward.1} parent=1 // pred_fallthru
      _
    // Predicated region
    $region26: #{projector_forward.1} parent=1 // pred_check
      _
    $region27: #{projector_forward.1} parent=1 // pred_check_branch
      %39 = sbr.rel (0) target = $region29
    $region28: #{projector_forward.1} parent=1 // pred_region
      _
    $region29: #{projector_forward.1} parent=1 // pred_fallthru
      _
    // Predicated region
    $region30: #{projector_forward.1} parent=1 // pred_check
      _
    $region31: #{projector_forward.1} parent=1 // pred_check_branch
      %41 = sbr.rel (0) target = $region33
    $region32: #{projector_forward.1} parent=1 // pred_region
      %s43 = ssub.s32 1024, 1024
      %44 = vsyncadd [#allocation6], %s43
      %s45 = sshll.u32 [#allocation5], 4
      %s46 = int_to_ptr.vmem [resolvable:$true] %s45
      %51 = dma.hbm_to_vmem [thread:$0]  %s7, 1024, %s46, [#allocation6], 64, 64, 4
    $region33: #{projector_forward.1} parent=1 // pred_fallthru
      _
    // Predicated region
    $region34: #{projector_forward.1} parent=1 // pred_check
      _
    $region35: #{projector_forward.1} parent=1 // pred_check_branch
      %53 = sbr.rel (0) target = $region37
    $region36: #{projector_forward.1} parent=1 // pred_region
      %54 = dma.done [#allocation3], 1024
    $region37: #{projector_forward.1} parent=1 // pred_fallthru
      _
    // Predicated region
    $region38: #{projector_forward.1} parent=1 // pred_check
      _
    $region39: #{projector_forward.1} parent=1 // pred_check_branch
      %56 = sbr.rel (0) target = $region41
    $region40: #{projector_forward.1} parent=1 // pred_region
      %57 = dma.done [#allocation6], 1024
    $region41: #{projector_forward.1} parent=1 // pred_fallthru
      _
    %v59 = vld [vmem:[%s0] sm:$0xf]
    %v60 = vld [vmem:[%s1] sm:$0xf]
    %v61 = vld [vmem:[%s1 + $0x4] sm:$0xf]
    %v62 = vld [vmem:[%s1 + $0x8] sm:$0xf]
    %v63 = vld [vmem:[%s1 + $0xc] sm:$0xf]
    %v68 = vunpack.c.l.b16 %v60
    %v69 = vunpack.c.l.b16 %v61
    %v70 = vunpack.c.l.b16 %v62
    %v71 = vunpack.c.l.b16 %v63
    %v72 = vpack.c.b16 %v69, %v68
    %v73 = vpack.c.b16 %v71, %v70
    %vm76 = vcmask 261120
    %v78 = vsel %vm76, %v59, 0
    %80 = vmatprep.subr.bf16.mxu0 0
    %81 = vmatpush1.bf16.msra.mxu0 %v72
    %82 = vmatprep.subr.bf16.mxu0 0
    %83 = vmatpush1.bf16.msra.mxu0 %v73
    %84 = vmatprep.subr.bf16.mxu0 0
    %85 = vmatpush1.bf16.msra.mxu0 0
    %86 = vmatprep.subr.bf16.mxu0 0
    %87 = vmatpush1.bf16.msra.mxu0 0
    %88 = vmatprep.subr.bf16.mxu0 0
    %89 = vmatpush1.bf16.msra.mxu0 0
    %90 = vmatprep.subr.bf16.mxu0 0
    %91 = vmatpush1.bf16.msra.mxu0 0
    %92 = vmatprep.subr.bf16.mxu0 0
    %93 = vmatpush1.bf16.msra.mxu0 0
    %94 = vmatprep.subr.bf16.mxu0 0
    %95 = vmatpush1.bf16.msra.mxu0 0
    %96 = vmatprep.subr.bf16.mxu0 0
    %97 = vmatpush1.bf16.msra.mxu0 0
    %98 = vmatprep.subr.bf16.mxu0 0
    %99 = vmatpush1.bf16.msra.mxu0 0
    %100 = vmatprep.subr.bf16.mxu0 0
    %101 = vmatpush1.bf16.msra.mxu0 0
    %102 = vmatprep.subr.bf16.mxu0 0
    %103 = vmatpush1.bf16.msra.mxu0 0
    %104 = vmatprep.subr.bf16.mxu0 0
    %105 = vmatpush1.bf16.msra.mxu0 0
    %106 = vmatprep.subr.bf16.mxu0 0
    %107 = vmatpush1.bf16.msra.mxu0 0
    %108 = vmatprep.subr.bf16.mxu0 0
    %109 = vmatpush1.bf16.msra.mxu0 0
    %110 = vmatprep.subr.bf16.mxu0 0
    %111 = vmatpush1.bf16.msra.mxu0 0
    %112 = vmatprep.mubr.bf16.mxu0 0
    %113 = vmatmul.mubr.bf16.gmra.mrb[0].mxu0 %v78
    %v114 = vpop.f32.mrb[0].mxu0
    %v115 = vadd.f32 0.0, %v114
    %v116 = vpop.f32.mrb[0].mxu0
    %v117 = vpop.f32.mrb[0].mxu0
    %v118 = vpop.f32.mrb[0].mxu0
    %119 = vdwg.mxu0
    %v120 = vld [vmem:[%s2] sm:$0x1]
    %v121 = vld [vmem:[%s3] sm:$0x1]
    %v122 = vrot.slane %v115, 4
    %v123 = vadd.f32 %v115, %v122
    %v124 = vrot.slane %v123, 2
    %v125 = vadd.f32 %v123, %v124
    %v126 = vrot.slane %v125, 1
    %v127 = vadd.f32 %v125, %v126
    %v128 = vmul.f32 %v127, 0.125
    %v129 = vmul.f32 %v115, %v115
    %v130 = vrot.slane %v129, 4
    %v131 = vadd.f32 %v129, %v130
    %v132 = vrot.slane %v131, 2
    %v133 = vadd.f32 %v131, %v132
    %v134 = vrot.slane %v133, 1
    %v135 = vadd.f32 %v133, %v134
    %v136 = vmul.f32 %v135, 0.125
    %v137 = vmul.f32 %v128, %v128
    %v138 = vsub.f32 %v136, %v137
    %v139 = vmax.f32 %v138, 0.0
    %v140 = vadd.f32 %v139, 1e-05
    %v141 = vrsqrt.pop %v140
    %v142 = vmul.f32 %v120, %v141
    %v143 = vmul.f32 %v128, %v142
    %v144 = vsub.f32 %v121, %v143
    %v146 = vlaneseq
    %v147 = vshrl.u32 %v146, 7
    %v148 = vsub.s32 0, %v147
    %v149 = vrot.slane %v142, %v148
    %v151 = vmul.f32 %v115, %v149
    %v153 = vlaneseq
    %v154 = vshrl.u32 %v153, 7
    %v155 = vsub.s32 0, %v154
    %v156 = vrot.slane %v144, %v155
    %v158 = vadd.f32 %v151, %v156
    %v159 = vmax.f32 %v158, 0.0
    %v160 = vpack.c.bf16 %v159, %v159
    %v161 = vld [vmem:[#allocation2] sm:$0xf]
    %v162 = vld [vmem:[#allocation2 + $0x4] sm:$0xf]
    %v163 = vld [vmem:[#allocation2 + $0x8] sm:$0xf]
    %v164 = vld [vmem:[#allocation2 + $0xc] sm:$0xf]
    %v165 = vld [vmem:[#allocation2 + $0x10] sm:$0xf]
    %v166 = vld [vmem:[#allocation2 + $0x14] sm:$0xf]
    %v167 = vld [vmem:[#allocation2 + $0x18] sm:$0xf]
    %v168 = vld [vmem:[#allocation2 + $0x1c] sm:$0xf]
    %v169 = vld [vmem:[#allocation2 + $0x20] sm:$0xf]
    %v170 = vld [vmem:[#allocation2 + $0x24] sm:$0xf]
    %v171 = vld [vmem:[#allocation2 + $0x28] sm:$0xf]
    %v172 = vld [vmem:[#allocation2 + $0x2c] sm:$0xf]
    %v173 = vld [vmem:[#allocation2 + $0x30] sm:$0xf]
    %v174 = vld [vmem:[#allocation2 + $0x34] sm:$0xf]
    %v175 = vld [vmem:[#allocation2 + $0x38] sm:$0xf]
    %v176 = vld [vmem:[#allocation2 + $0x3c] sm:$0xf]
    %v193 = vunpack.c.l.b16 %v161
    %v194 = vunpack.c.l.b16 %v162
    %v195 = vunpack.c.l.b16 %v163
    %v196 = vunpack.c.l.b16 %v164
    %v197 = vunpack.c.l.b16 %v165
    %v198 = vunpack.c.l.b16 %v166
    %v199 = vunpack.c.l.b16 %v167
    %v200 = vunpack.c.l.b16 %v168
    %v201 = vunpack.c.l.b16 %v169
    %v202 = vunpack.c.l.b16 %v170
    %v203 = vunpack.c.l.b16 %v171
    %v204 = vunpack.c.l.b16 %v172
    %v205 = vunpack.c.l.b16 %v173
    %v206 = vunpack.c.l.b16 %v174
    %v207 = vunpack.c.l.b16 %v175
    %v208 = vunpack.c.l.b16 %v176
    %v209 = vpack.c.b16 %v194, %v193
    %v210 = vpack.c.b16 %v196, %v195
    %v211 = vpack.c.b16 %v198, %v197
    %v212 = vpack.c.b16 %v200, %v199
    %v213 = vpack.c.b16 %v202, %v201
    %v214 = vpack.c.b16 %v204, %v203
    %v215 = vpack.c.b16 %v206, %v205
    %v216 = vpack.c.b16 %v208, %v207
    %225 = vmatprep.subr.bf16.mxu0 0
    %226 = vmatpush1.bf16.msra.mxu0 %v209
    %227 = vmatprep.subr.bf16.mxu0 0
    %228 = vmatpush1.bf16.msra.mxu0 %v210
    %229 = vmatprep.subr.bf16.mxu0 0
    %230 = vmatpush1.bf16.msra.mxu0 %v211
    %231 = vmatprep.subr.bf16.mxu0 0
    %232 = vmatpush1.bf16.msra.mxu0 %v212
    %233 = vmatprep.subr.bf16.mxu0 0
    %234 = vmatpush1.bf16.msra.mxu0 %v213
    %235 = vmatprep.subr.bf16.mxu0 0
    %236 = vmatpush1.bf16.msra.mxu0 %v214
    %237 = vmatprep.subr.bf16.mxu0 0
    %238 = vmatpush1.bf16.msra.mxu0 %v215
    %239 = vmatprep.subr.bf16.mxu0 0
    %240 = vmatpush1.bf16.msra.mxu0 %v216
    %241 = vmatprep.subr.bf16.mxu0 0
    %242 = vmatpush1.bf16.msra.mxu0 0
    %243 = vmatprep.subr.bf16.mxu0 0
    %244 = vmatpush1.bf16.msra.mxu0 0
    %245 = vmatprep.subr.bf16.mxu0 0
    %246 = vmatpush1.bf16.msra.mxu0 0
    %247 = vmatprep.subr.bf16.mxu0 0
    %248 = vmatpush1.bf16.msra.mxu0 0
    %249 = vmatprep.subr.bf16.mxu0 0
    %250 = vmatpush1.bf16.msra.mxu0 0
    %251 = vmatprep.subr.bf16.mxu0 0
    %252 = vmatpush1.bf16.msra.mxu0 0
    %253 = vmatprep.subr.bf16.mxu0 0
    %254 = vmatpush1.bf16.msra.mxu0 0
    %255 = vmatprep.subr.bf16.mxu0 0
    %256 = vmatpush1.bf16.msra.mxu0 0
    %257 = vmatprep.mubr.bf16.mxu0 0
    %258 = vmatmul.mubr.bf16.gmra.mrb[0].mxu0 %v160
    %v259 = vpop.f32.mrb[0].mxu0
    %v260 = vadd.f32 0.0, %v259
    %v261 = vpop.f32.mrb[0].mxu0
    %v262 = vpop.f32.mrb[0].mxu0
    %v263 = vpop.f32.mrb[0].mxu0
    %264 = vdwg.mxu0
    %v265 = vld [vmem:[%s5] sm:$0x1]
    %v266 = vld [vmem:[%s6] sm:$0x1]
    %v267 = vrot.slane %v260, 4
    %v268 = vadd.f32 %v260, %v267
    %v269 = vrot.slane %v268, 2
    %v270 = vadd.f32 %v268, %v269
    %v271 = vrot.slane %v270, 1
    %v272 = vadd.f32 %v270, %v271
    %v273 = vmul.f32 %v272, 0.125
    %v274 = vmul.f32 %v260, %v260
    %v275 = vrot.slane %v274, 4
    %v276 = vadd.f32 %v274, %v275
    %v277 = vrot.slane %v276, 2
    %v278 = vadd.f32 %v276, %v277
    %v279 = vrot.slane %v278, 1
    %v280 = vadd.f32 %v278, %v279
    %v281 = vmul.f32 %v280, 0.125
    %v282 = vmul.f32 %v273, %v273
    %v283 = vsub.f32 %v281, %v282
    %v284 = vmax.f32 %v283, 0.0
    %v285 = vadd.f32 %v284, 1e-05
    %v286 = vrsqrt.pop %v285
    %v287 = vmul.f32 %v265, %v286
    %v288 = vmul.f32 %v273, %v287
    %v289 = vsub.f32 %v266, %v288
    %v291 = vlaneseq
    %v292 = vshrl.u32 %v291, 7
    %v293 = vsub.s32 0, %v292
    %v294 = vrot.slane %v287, %v293
    %v296 = vmul.f32 %v260, %v294
    %v298 = vlaneseq
    %v299 = vshrl.u32 %v298, 7
    %v300 = vsub.s32 0, %v299
    %v301 = vrot.slane %v289, %v300
    %v303 = vadd.f32 %v296, %v301
    %v304 = vmax.f32 %v303, 0.0
    %v305 = vpack.c.bf16 %v304, %v304
    %v306 = vld [vmem:[#allocation5] sm:$0xf]
    %v307 = vld [vmem:[#allocation5 + $0x4] sm:$0xf]
    %v308 = vld [vmem:[#allocation5 + $0x8] sm:$0xf]
    %v309 = vld [vmem:[#allocation5 + $0xc] sm:$0xf]
    %v310 = vld [vmem:[#allocation5 + $0x10] sm:$0xf]
    %v311 = vld [vmem:[#allocation5 + $0x14] sm:$0xf]
    %v312 = vld [vmem:[#allocation5 + $0x18] sm:$0xf]
    %v313 = vld [vmem:[#allocation5 + $0x1c] sm:$0xf]
    %v314 = vld [vmem:[#allocation5 + $0x20] sm:$0xf]
    %v315 = vld [vmem:[#allocation5 + $0x24] sm:$0xf]
    %v316 = vld [vmem:[#allocation5 + $0x28] sm:$0xf]
    %v317 = vld [vmem:[#allocation5 + $0x2c] sm:$0xf]
    %v318 = vld [vmem:[#allocation5 + $0x30] sm:$0xf]
    %v319 = vld [vmem:[#allocation5 + $0x34] sm:$0xf]
    %v320 = vld [vmem:[#allocation5 + $0x38] sm:$0xf]
    %v321 = vld [vmem:[#allocation5 + $0x3c] sm:$0xf]
    %v338 = vunpack.c.l.b16 %v306
    %v339 = vunpack.c.l.b16 %v307
    %v340 = vunpack.c.l.b16 %v308
    %v341 = vunpack.c.l.b16 %v309
    %v342 = vunpack.c.l.b16 %v310
    %v343 = vunpack.c.l.b16 %v311
    %v344 = vunpack.c.l.b16 %v312
    %v345 = vunpack.c.l.b16 %v313
    %v346 = vunpack.c.l.b16 %v314
    %v347 = vunpack.c.l.b16 %v315
    %v348 = vunpack.c.l.b16 %v316
    %v349 = vunpack.c.l.b16 %v317
    %v350 = vunpack.c.l.b16 %v318
    %v351 = vunpack.c.l.b16 %v319
    %v352 = vunpack.c.l.b16 %v320
    %v353 = vunpack.c.l.b16 %v321
    %v354 = vpack.c.b16 %v339, %v338
    %v355 = vpack.c.b16 %v341, %v340
    %v356 = vpack.c.b16 %v343, %v342
    %v357 = vpack.c.b16 %v345, %v344
    %v358 = vpack.c.b16 %v347, %v346
    %v359 = vpack.c.b16 %v349, %v348
    %v360 = vpack.c.b16 %v351, %v350
    %v361 = vpack.c.b16 %v353, %v352
    %370 = vmatprep.subr.bf16.mxu0 0
    %371 = vmatpush1.bf16.msra.mxu0 %v354
    %372 = vmatprep.subr.bf16.mxu0 0
    %373 = vmatpush1.bf16.msra.mxu0 %v355
    %374 = vmatprep.subr.bf16.mxu0 0
    %375 = vmatpush1.bf16.msra.mxu0 %v356
    %376 = vmatprep.subr.bf16.mxu0 0
    %377 = vmatpush1.bf16.msra.mxu0 %v357
    %378 = vmatprep.subr.bf16.mxu0 0
    %379 = vmatpush1.bf16.msra.mxu0 %v358
    %380 = vmatprep.subr.bf16.mxu0 0
    %381 = vmatpush1.bf16.msra.mxu0 %v359
    %382 = vmatprep.subr.bf16.mxu0 0
    %383 = vmatpush1.bf16.msra.mxu0 %v360
    %384 = vmatprep.subr.bf16.mxu0 0
    %385 = vmatpush1.bf16.msra.mxu0 %v361
    %386 = vmatprep.subr.bf16.mxu0 0
    %387 = vmatpush1.bf16.msra.mxu0 0
    %388 = vmatprep.subr.bf16.mxu0 0
    %389 = vmatpush1.bf16.msra.mxu0 0
    %390 = vmatprep.subr.bf16.mxu0 0
    %391 = vmatpush1.bf16.msra.mxu0 0
    %392 = vmatprep.subr.bf16.mxu0 0
    %393 = vmatpush1.bf16.msra.mxu0 0
    %394 = vmatprep.subr.bf16.mxu0 0
    %395 = vmatpush1.bf16.msra.mxu0 0
    %396 = vmatprep.subr.bf16.mxu0 0
    %397 = vmatpush1.bf16.msra.mxu0 0
    %398 = vmatprep.subr.bf16.mxu0 0
    %399 = vmatpush1.bf16.msra.mxu0 0
    %400 = vmatprep.subr.bf16.mxu0 0
    %401 = vmatpush1.bf16.msra.mxu0 0
    %402 = vmatprep.mubr.bf16.mxu0 0
    %403 = vmatmul.mubr.bf16.gmra.mrb[0].mxu0 %v305
    %v404 = vpop.f32.mrb[0].mxu0
    %v405 = vadd.f32 0.0, %v404
    %v406 = vpop.f32.mrb[0].mxu0
    %v407 = vpop.f32.mrb[0].mxu0
    %v408 = vpop.f32.mrb[0].mxu0
    %409 = vdwg.mxu0
    %410 = vst [vmem:[#allocation7] sm:$0xff] %v405
    // Predicated region
    $region42: #{projector_forward.1} parent=1 // pred_check
      _
    $region43: #{projector_forward.1} parent=1 // pred_check_branch
      %412 = sbr.rel (0) target = $region45
    $region44: #{projector_forward.1} parent=1 // pred_region
      %s414 = ssub.s32 128, 128
      %415 = vsyncadd [#allocation4], %s414
      %s417 = sshll.u32 [#allocation7], 4
      %s418 = int_to_ptr.vmem [resolvable:$true] %s417
      %420 = dma.vmem_to_hbm [thread:$0]  %s418, 128, %s8, [#allocation4]
    $region45: #{projector_forward.1} parent=1 // pred_fallthru
      _
    // Predicated region
    $region46: #{projector_forward.1} parent=1 // pred_check
      _
    $region47: #{projector_forward.1} parent=1 // pred_check_branch
      %422 = sbr.rel (0) target = $region49
    $region48: #{projector_forward.1} parent=1 // pred_region
      %423 = dma.done [#allocation4], 128
    $region49: #{projector_forward.1} parent=1 // pred_fallthru
      _
    %424 = vsyncpa [#allocation3], 1
    %425 = vsyncpa [#allocation6], 1
    %426 = vsyncpa [#allocation4], 1

</llo_original>
